<compile_context>
chip_gen: v7x
topology: tpu7x:2x2x1
jax: 0.10.0
libtpu: 0.0.40
codegen_flags: <defaults>
</compile_context>

<pallas_src>
import math

import jax
import jax.numpy as jnp
from jax.experimental import pallas as pl
from jax.experimental.pallas import tpu as pltpu


def _round_up(x: int, m: int) -> int:
    return ((x + m - 1) // m) * m


# -----------------------------------------------------------------------------
# Pallas kernel: windowed-frame rows @ fused (cos|sin) DFT basis, lane-dense out
# -----------------------------------------------------------------------------
def _stft_matmul_kernel(frames_ref, basis_ref, out_ref):
    # frames_ref : (tile_rows, n_fft)        f32
    # basis_ref  : (n_fft, 2*F_pad)          f32  (window already folded in)
    # out_ref    : (tile_rows, 2*F_pad)      f32  -> [real | imag]
    out_ref[...] = jnp.dot(frames_ref[...], basis_ref[...],
                           preferred_element_type=jnp.float32)


def _stft_pallas(frames, basis, tile_rows):
    """frames: (R_pad, n_fft) f32, basis: (n_fft, W) f32 -> (R_pad, W) f32."""
    R_pad, n_fft = frames.shape
    _, W = basis.shape
    grid = (R_pad // tile_rows,)

    grid_spec = pltpu.PrefetchScalarGridSpec(
        num_scalar_prefetch=0,
        grid=grid,
        in_specs=[
            pl.BlockSpec((tile_rows, n_fft), lambda i: (i, 0)),
            pl.BlockSpec((n_fft, W), lambda i: (0, 0)),
        ],
        out_specs=pl.BlockSpec((tile_rows, W), lambda i: (i, 0)),
    )

    return pl.pallas_call(
        _stft_matmul_kernel,
        out_shape=jax.ShapeDtypeStruct((R_pad, W), jnp.float32),
        grid_spec=grid_spec,
        compiler_params=pltpu.CompilerParams(
            dimension_semantics=("parallel",)),
    )(frames, basis)


# -----------------------------------------------------------------------------
# Frame extraction without a gather (hop divides n_fft -> shifted block views)
# -----------------------------------------------------------------------------
def _extract_frames(x2, n_fft, hop_length, T):
    BC, _ = x2.shape
    if n_fft % hop_length == 0:
        k = n_fft // hop_length
        n_blocks = T + k - 1
        blocks = x2[:, :n_blocks * hop_length].reshape(BC, n_blocks, hop_length)
        parts = [blocks[:, j:j + T, :] for j in range(k)]
        frames = jnp.concatenate(parts, axis=-1)          # (BC, T, n_fft)
    else:
        # fallback: strided gather (not hit for the module defaults)
        idx = jnp.arange(T)[:, None] * hop_length + jnp.arange(n_fft)[None, :]
        frames = x2[:, idx]
    return frames


# -----------------------------------------------------------------------------
# STFTLayer forward (matches PyTorch module defaults)
# -----------------------------------------------------------------------------
def stft_layer_forward(x,
                       n_fft: int = 128,
                       win_length: int = None,
                       hop_length: int = 64,
                       center: bool = True,
                       normalized: bool = False,
                       onesided: bool = True,
                       pad_mode: str = "reflect"):
    """
    x: (B, L) or (B, C, L) float32
    returns complex64 (B, F, T) or (B, C, F, T), F = n_fft//2 + 1 (onesided)
    """
    assert x.ndim in (2, 3)
    win_length = win_length if win_length else n_fft

    multi_channel = x.ndim == 3
    if multi_channel:
        B, C, L = x.shape
        x2 = x.reshape(B * C, L)
    else:
        B, L = x.shape
        x2 = x
    x2 = x2.astype(jnp.float32)

    # hann window (torch.hann_window: periodic=True) padded to n_fft length
    n = jnp.arange(win_length, dtype=jnp.float32)
    window = 0.5 - 0.5 * jnp.cos(2.0 * jnp.pi * n / win_length)
    n_pad_left = (n_fft - win_length) // 2
    n_pad_right = n_fft - win_length - n_pad_left
    window = jnp.concatenate(
        [jnp.zeros((n_pad_left,), jnp.float32),
         window,
         jnp.zeros((n_pad_right,), jnp.float32)], axis=0)   # (n_fft,)

    # center padding (reflect, like torch.stft center=True)
    if center:
        pad = n_fft // 2
        x2 = jnp.pad(x2, ((0, 0), (pad, pad)), mode=pad_mode)

    BC, Lp = x2.shape
    T = 1 + (Lp - n_fft) // hop_length

    # frames (no gather): (BC, T, n_fft) -> flatten rows
    frames = _extract_frames(x2, n_fft, hop_length, T)
    frames = frames.reshape(BC * T, n_fft)

    # fused, window-folded, zero-padded DFT basis: [w*cos | 0 | -w*sin | 0]
    F = n_fft // 2 + 1 if onesided else n_fft
    F_pad = _round_up(F, 128)
    nn = jnp.arange(n_fft, dtype=jnp.float32)[:, None]
    ff = jnp.arange(F, dtype=jnp.float32)[None, :]
    ang = 2.0 * jnp.pi * nn * ff / n_fft
    scale = (1.0 / math.sqrt(n_fft)) if normalized else 1.0
    cos_w = (window[:, None] * jnp.cos(ang)) * scale        # (n_fft, F)
    sin_w = (window[:, None] * (-jnp.sin(ang))) * scale     # (n_fft, F)
    zpad = jnp.zeros((n_fft, F_pad - F), jnp.float32)
    basis = jnp.concatenate([cos_w, zpad, sin_w, zpad], axis=1)  # (n_fft, 2*F_pad)

    # row tiling: big lane/sublane-dense tiles, small VMEM footprint
    R = BC * T
    tile_rows = min(256, _round_up(R, 8))
    R_pad = _round_up(R, tile_rows)
    if R_pad != R:
        frames = jnp.pad(frames, ((0, R_pad - R), (0, 0)))

    out = _stft_pallas(frames, basis, tile_rows)            # (R_pad, 2*F_pad)

    out = out[:R].reshape(BC, T, 2 * F_pad)
    re = out[..., :F]
    im = out[..., F_pad:F_pad + F]
    spec = (re + 1j * im).astype(jnp.complex64)             # (BC, T, F)
    spec = jnp.transpose(spec, (0, 2, 1))                   # (BC, F, T)
    if multi_channel:
        spec = spec.reshape(B, C, F, T)
    return spec


# -----------------------------------------------------------------------------
# Pure-JAX reference (no Pallas) for a correctness check
# -----------------------------------------------------------------------------
def _reference_stft(x, n_fft=128, hop_length=64):
    multi_channel = x.ndim == 3
    if multi_channel:
        B, C, L = x.shape
        x2 = x.reshape(B * C, L)
    else:
        x2 = x
    n = jnp.arange(n_fft, dtype=jnp.float32)
    window = 0.5 - 0.5 * jnp.cos(2.0 * jnp.pi * n / n_fft)
    pad = n_fft // 2
    x2 = jnp.pad(x2, ((0, 0), (pad, pad)), mode="reflect")
    Lp = x2.shape[-1]
    T = 1 + (Lp - n_fft) // hop_length
    idx = jnp.arange(T)[:, None] * hop_length + jnp.arange(n_fft)[None, :]
    frames = x2[:, idx] * window[None, None, :]
    spec = jnp.fft.rfft(frames, n=n_fft, axis=-1)           # (BC, T, F)
    spec = jnp.transpose(spec, (0, 2, 1))                   # (BC, F, T)
    if multi_channel:
        spec = spec.reshape(B, C, spec.shape[1], spec.shape[2])
    return spec.astype(jnp.complex64)


if __name__ == "__main__":
    key = jax.random.PRNGKey(0)
    B, C, L = 2, 3, 256
    x = jax.random.normal(key, (B, C, L), dtype=jnp.float32)

    out = stft_layer_forward(x)          # (B, C, F, T) complex64
    out = jax.block_until_ready(out)

    ref = _reference_stft(x)
    assert out.shape == ref.shape, (out.shape, ref.shape)
    err = jnp.max(jnp.abs(out - ref))
    assert float(err) < 1e-2, f"max abs error too large: {err}"

    print("KERNEL_OK")
</pallas_src>

<mosaic_0001>
module attributes {stable_mosaic.version = 11 : i64} {
  func.func @_stft_matmul_kernel(%arg0: i32, %arg1: memref<32x128xf32, #tpu.memory_space<vmem>>, %arg2: memref<128x256xf32, #tpu.memory_space<vmem>>, %arg3: memref<32x256xf32, #tpu.memory_space<vmem>>) attributes {dimension_semantics = [#tpu.dimension_semantics<parallel>], iteration_bounds = array<i64: 1>, scalar_prefetch = 0 : i64, scratch_operands = 0 : i64, tpu.core_type = #tpu.core_type<tc>, window_params = [{transform_indices = @transform_0, window_bounds = array<i64: 32, 128>}, {pipeline_mode = #tpu.pipeline_mode<synchronous>, transform_indices = @transform_1, window_bounds = array<i64: 128, 256>}, {transform_indices = @transform_2, window_bounds = array<i64: 32, 256>}]} {
    %c0 = arith.constant 0 : index
    %c0_0 = arith.constant 0 : index
    %0 = vector.load %arg1[%c0, %c0_0] : memref<32x128xf32, #tpu.memory_space<vmem>>, vector<32x128xf32>
    %c0_1 = arith.constant 0 : index
    %c0_2 = arith.constant 0 : index
    %1 = vector.load %arg2[%c0_1, %c0_2] : memref<128x256xf32, #tpu.memory_space<vmem>>, vector<128x256xf32>
    %cst = arith.constant dense<0.000000e+00> : vector<32x256xf32>
    %2 = tpu.matmul %0, %1, %cst {dimension_numbers = #tpu.dot_dimension_numbers<[1], [0], [0], [1], [0, 0, 1, 1], [], []>} : vector<32x128xf32>, vector<128x256xf32>, vector<32x256xf32> -> vector<32x256xf32>
    %c0_3 = arith.constant 0 : index
    %c0_4 = arith.constant 0 : index
    %3 = vector.load %arg3[%c0_3, %c0_4] : memref<32x256xf32, #tpu.memory_space<vmem>>, vector<32x256xf32>
    tpu.vector_store %arg3[%c0_3, %c0_4], %2 {strides = array<i32>} : memref<32x256xf32, #tpu.memory_space<vmem>>, vector<32x256xf32>,
    return
  }
  func.func @transform_0(%arg0: i32) -> (i32, i32) {
    %c0_i32 = arith.constant 0 : i32
    %c0_i32_0 = arith.constant 0 : i32
    return %arg0, %c0_i32 : i32, i32
  }
  func.func @transform_1(%arg0: i32) -> (i32, i32) {
    %c0_i32 = arith.constant 0 : i32
    %c0_i32_0 = arith.constant 0 : i32
    %c0_i32_1 = arith.constant 0 : i32
    return %c0_i32, %c0_i32_0 : i32, i32
  }
  func.func @transform_2(%arg0: i32) -> (i32, i32) {
    %c0_i32 = arith.constant 0 : i32
    %c0_i32_0 = arith.constant 0 : i32
    return %arg0, %c0_i32 : i32, i32
  }
}

</mosaic_0001>

<llo_original>
// kernel: tpu_custom_call.1
$region0: #{tpu_custom_call.1}
  #allocation0 [shape = 'u32[]', space=smem, size = 0x4, offset = 0x4, fixed_abs, tag = 'smem constant byte address 0x4 - core index']
  #allocation1 [shape = 'u32[144,128]{1,0:T(1,128)}', space=vmem, size = 0x12000, scoped, tag = 'internal scratch']
  %s0 = inlined_call_operand.hbm [shape: f32[32,128], index: 0, kind: input, shape index: {}]
  %s1 = inlined_call_operand.hbm [shape: f32[128,256], index: 1, kind: input, shape index: {}]
  %s2 = inlined_call_operand.hbm [shape: f32[32,256], index: 2, kind: output, shape index: {}]
  %s3 = sld [smem:[#allocation0]]
  $region26: #{tpu_custom_call.1} parent=0
    _
  %s5 = ssub.s32 1, %s3
  %s6 = scalar_select 0, %s5, %s3
  $region1: #{tpu_custom_call.1} parent=0
    #allocation2 [shape = 'u8[16384]{0}', space=vmem, size = 0x4000, scoped, tag = 'input window, operand 0, single buffered']
    #allocation3 [shape = 's32[1]{0}', space=sflag, size = 0x4, scoped, tag = 'scoped memory for tpu_custom_call.1']
    #allocation4 [shape = 's32[1]{0}', space=sflag, size = 0x4, scoped, tag = 'scoped memory for tpu_custom_call.1']
    #allocation5 [shape = 'u8[131072]{0}', space=vmem, size = 0x20000, scoped, tag = 'input window, operand 1, single buffered']
    #allocation6 [shape = 's32[1]{0}', space=sflag, size = 0x4, scoped, tag = 'scoped memory for tpu_custom_call.1']
    #allocation7 [shape = 'u8[32768]{0}', space=vmem, size = 0x8000, scoped, tag = 'output window, operand 0, single buffered']
    %7 = vsyncpa [#allocation3], 0
    %8 = vsyncpa [#allocation6], 0
    %9 = vsyncpa [#allocation4], 0
    // Predicated region
    $region2: #{tpu_custom_call.1} parent=1 // pred_check
      _
    $region3: #{tpu_custom_call.1} parent=1 // pred_check_branch
      %11 = sbr.rel (0) target = $region5
    $region4: #{tpu_custom_call.1} parent=1 // pred_region
      %s13 = ssub.s32 512, 512
      %14 = vsyncadd [#allocation3], %s13
      %s15 = sshll.u32 [#allocation2], 4
      %s16 = int_to_ptr.vmem [resolvable:$true] %s15
      %21 = dma.hbm_to_vmem [thread:$0]  %s0, 512, %s16, [#allocation3], 128, 128, 8
    $region5: #{tpu_custom_call.1} parent=1 // pred_fallthru
      _
    // Predicated region
    $region6: #{tpu_custom_call.1} parent=1 // pred_check
      _
    $region7: #{tpu_custom_call.1} parent=1 // pred_check_branch
      %23 = sbr.rel (0) target = $region9
    $region8: #{tpu_custom_call.1} parent=1 // pred_region
      %s25 = ssub.s32 4096, 4096
      %26 = vsyncadd [#allocation6], %s25
      %s27 = sshll.u32 [#allocation5], 4
      %s28 = int_to_ptr.vmem [resolvable:$true] %s27
      %33 = dma.hbm_to_vmem [thread:$0]  %s1, 4096, %s28, [#allocation6], 256, 256, 16
    $region9: #{tpu_custom_call.1} parent=1 // pred_fallthru
      _
    // Predicated region
    $region10: #{tpu_custom_call.1} parent=1 // pred_check
      _
    $region11: #{tpu_custom_call.1} parent=1 // pred_check_branch
      %35 = sbr.rel (0) target = $region13
    $region12: #{tpu_custom_call.1} parent=1 // pred_region
      %36 = dma.done [#allocation3], 512
    $region13: #{tpu_custom_call.1} parent=1 // pred_fallthru
      _
    // Predicated region
    $region14: #{tpu_custom_call.1} parent=1 // pred_check
      _
    $region15: #{tpu_custom_call.1} parent=1 // pred_check_branch
      %38 = sbr.rel (0) target = $region17
    $region16: #{tpu_custom_call.1} parent=1 // pred_region
      %39 = dma.done [#allocation6], 4096
    $region17: #{tpu_custom_call.1} parent=1 // pred_fallthru
      _
    %v40 = vld [vmem:[#allocation2] sm:$0xff]
    %v41 = vld [vmem:[#allocation2 + $0x8] sm:$0xff]
    %v42 = vld [vmem:[#allocation2 + $0x10] sm:$0xff]
    %v43 = vld [vmem:[#allocation2 + $0x18] sm:$0xff]
    %v44 = vld [vmem:[#allocation5] sm:$0xff]
    %v45 = vld [vmem:[#allocation5 + $0x8] sm:$0xff]
    %v46 = vld [vmem:[#allocation5 + $0x10] sm:$0xff]
    %v47 = vld [vmem:[#allocation5 + $0x18] sm:$0xff]
    %v48 = vld [vmem:[#allocation5 + $0x20] sm:$0xff]
    %v49 = vld [vmem:[#allocation5 + $0x28] sm:$0xff]
    %v50 = vld [vmem:[#allocation5 + $0x30] sm:$0xff]
    %v51 = vld [vmem:[#allocation5 + $0x38] sm:$0xff]
    %v52 = vld [vmem:[#allocation5 + $0x40] sm:$0xff]
    %v53 = vld [vmem:[#allocation5 + $0x48] sm:$0xff]
    %v54 = vld [vmem:[#allocation5 + $0x50] sm:$0xff]
    %v55 = vld [vmem:[#allocation5 + $0x58] sm:$0xff]
    %v56 = vld [vmem:[#allocation5 + $0x60] sm:$0xff]
    %v57 = vld [vmem:[#allocation5 + $0x68] sm:$0xff]
    %v58 = vld [vmem:[#allocation5 + $0x70] sm:$0xff]
    %v59 = vld [vmem:[#allocation5 + $0x78] sm:$0xff]
    %v60 = vld [vmem:[#allocation5 + $0x80] sm:$0xff]
    %v61 = vld [vmem:[#allocation5 + $0x88] sm:$0xff]
    %v62 = vld [vmem:[#allocation5 + $0x90] sm:$0xff]
    %v63 = vld [vmem:[#allocation5 + $0x98] sm:$0xff]
    %v64 = vld [vmem:[#allocation5 + $0xa0] sm:$0xff]
    %v65 = vld [vmem:[#allocation5 + $0xa8] sm:$0xff]
    %v66 = vld [vmem:[#allocation5 + $0xb0] sm:$0xff]
    %v67 = vld [vmem:[#allocation5 + $0xb8] sm:$0xff]
    %v68 = vld [vmem:[#allocation5 + $0xc0] sm:$0xff]
    %v69 = vld [vmem:[#allocation5 + $0xc8] sm:$0xff]
    %v70 = vld [vmem:[#allocation5 + $0xd0] sm:$0xff]
    %v71 = vld [vmem:[#allocation5 + $0xd8] sm:$0xff]
    %v72 = vld [vmem:[#allocation5 + $0xe0] sm:$0xff]
    %v73 = vld [vmem:[#allocation5 + $0xe8] sm:$0xff]
    %v74 = vld [vmem:[#allocation5 + $0xf0] sm:$0xff]
    %v75 = vld [vmem:[#allocation5 + $0xf8] sm:$0xff]
    %76 = vmatprep.subr.mxu0 %v45
    %77 = vmatpush1.msra.mxu0 %v44
    %78 = vmatprep.subr.mxu0 %v47
    %79 = vmatpush1.msra.mxu0 %v46
    %80 = vmatprep.subr.mxu0 %v49
    %81 = vmatpush1.msra.mxu0 %v48
    %82 = vmatprep.subr.mxu0 %v51
    %83 = vmatpush1.msra.mxu0 %v50
    %84 = vmatprep.subr.mxu0 %v53
    %85 = vmatpush1.msra.mxu0 %v52
    %86 = vmatprep.subr.mxu0 %v55
    %87 = vmatpush1.msra.mxu0 %v54
    %88 = vmatprep.subr.mxu0 %v57
    %89 = vmatpush1.msra.mxu0 %v56
    %90 = vmatprep.subr.mxu0 %v59
    %91 = vmatpush1.msra.mxu0 %v58
    %92 = vmatprep.subr.mxu0 %v61
    %93 = vmatpush1.msra.mxu0 %v60
    %94 = vmatprep.subr.mxu0 %v63
    %95 = vmatpush1.msra.mxu0 %v62
    %96 = vmatprep.subr.mxu0 %v65
    %97 = vmatpush1.msra.mxu0 %v64
    %98 = vmatprep.subr.mxu0 %v67
    %99 = vmatpush1.msra.mxu0 %v66
    %100 = vmatprep.subr.mxu0 %v69
    %101 = vmatpush1.msra.mxu0 %v68
    %102 = vmatprep.subr.mxu0 %v71
    %103 = vmatpush1.msra.mxu0 %v70
    %104 = vmatprep.subr.mxu0 %v73
    %105 = vmatpush1.msra.mxu0 %v72
    %106 = vmatprep.subr.mxu0 %v75
    %107 = vmatpush1.msra.mxu0 %v74
    %108 = vmatprep.subr.mxu0 0.0
    %109 = vmatpush1.msra.mxu0 0.0
    %110 = vmatprep.subr.mxu0 0.0
    %111 = vmatpush1.msra.mxu0 0.0
    %112 = vmatprep.subr.mxu0 0.0
    %113 = vmatpush1.msra.mxu0 0.0
    %114 = vmatprep.subr.mxu0 0.0
    %115 = vmatpush1.msra.mxu0 0.0
    %116 = vmatprep.subr.mxu0 0.0
    %117 = vmatpush1.msra.mxu0 0.0
    %118 = vmatprep.subr.mxu0 0.0
    %119 = vmatpush1.msra.mxu0 0.0
    %120 = vmatprep.subr.mxu0 0.0
    %121 = vmatpush1.msra.mxu0 0.0
    %122 = vmatprep.subr.mxu0 0.0
    %123 = vmatpush1.msra.mxu0 0.0
    %124 = vmatprep.subr.mxu0 0.0
    %125 = vmatpush1.msra.mxu0 0.0
    %126 = vmatprep.subr.mxu0 0.0
    %127 = vmatpush1.msra.mxu0 0.0
    %128 = vmatprep.subr.mxu0 0.0
    %129 = vmatpush1.msra.mxu0 0.0
    %130 = vmatprep.subr.mxu0 0.0
    %131 = vmatpush1.msra.mxu0 0.0
    %132 = vmatprep.subr.mxu0 0.0
    %133 = vmatpush1.msra.mxu0 0.0
    %134 = vmatprep.subr.mxu0 0.0
    %135 = vmatpush1.msra.mxu0 0.0
    %136 = vmatprep.subr.mxu0 0.0
    %137 = vmatpush1.msra.mxu0 0.0
    %138 = vmatprep.subr.mxu0 0.0
    %139 = vmatpush1.msra.mxu0 0.0
    %140 = vmatprep.mubr.f32.mxu0 0.0
    %141 = vmatmul.mubr.f32.gmra.mrb[0].mxu0 %v40
    %v142 = vpop.f32.mrb[0].mxu0
    %v143 = vadd.f32 0.0, %v142
    %v144 = vpop.f32.mrb[0].mxu0
    %v145 = vadd.f32 0.0, %v144
    %146 = vmatprep.mubr.f32.mxu0 0.0
    %147 = vmatmul.mubr.f32.gmra.mrb[0].mxu0 %v41
    %v148 = vpop.f32.mrb[0].mxu0
    %v149 = vadd.f32 0.0, %v148
    %v150 = vpop.f32.mrb[0].mxu0
    %v151 = vadd.f32 0.0, %v150
    %152 = vmatprep.mubr.f32.mxu0 0.0
    %153 = vmatmul.mubr.f32.gmra.mrb[0].mxu0 %v42
    %v154 = vpop.f32.mrb[0].mxu0
    %v155 = vadd.f32 0.0, %v154
    %v156 = vpop.f32.mrb[0].mxu0
    %v157 = vadd.f32 0.0, %v156
    %158 = vmatprep.mubr.f32.mxu0 0.0
    %159 = vmatmul.mubr.f32.gmra.mrb[0].mxu0 %v43
    %v160 = vpop.f32.mrb[0].mxu0
    %v161 = vadd.f32 0.0, %v160
    %v162 = vpop.f32.mrb[0].mxu0
    %v163 = vadd.f32 0.0, %v162
    %164 = vdwg.mxu0
    %165 = vst [vmem:[#allocation7] sm:$0xff] %v143
    %166 = vst [vmem:[#allocation7 + $0x8] sm:$0xff] %v145
    %167 = vst [vmem:[#allocation7 + $0x10] sm:$0xff] %v149
    %168 = vst [vmem:[#allocation7 + $0x18] sm:$0xff] %v151
    %169 = vst [vmem:[#allocation7 + $0x20] sm:$0xff] %v155
    %170 = vst [vmem:[#allocation7 + $0x28] sm:$0xff] %v157
    %171 = vst [vmem:[#allocation7 + $0x30] sm:$0xff] %v161
    %172 = vst [vmem:[#allocation7 + $0x38] sm:$0xff] %v163
    // Predicated region
    $region18: #{tpu_custom_call.1} parent=1 // pred_check
      _
    $region19: #{tpu_custom_call.1} parent=1 // pred_check_branch
      %174 = sbr.rel (0) target = $region21
    $region20: #{tpu_custom_call.1} parent=1 // pred_region
      %s176 = ssub.s32 1024, 1024
      %177 = vsyncadd [#allocation4], %s176
      %s178 = sshll.u32 [#allocation7], 4
      %s179 = int_to_ptr.vmem [resolvable:$true] %s178
      %184 = dma.vmem_to_hbm [thread:$0]  %s179, 1024, %s2, [#allocation4], 256, 256, 16
    $region21: #{tpu_custom_call.1} parent=1 // pred_fallthru
      _
    // Predicated region
    $region22: #{tpu_custom_call.1} parent=1 // pred_check
      _
    $region23: #{tpu_custom_call.1} parent=1 // pred_check_branch
      %186 = sbr.rel (0) target = $region25
    $region24: #{tpu_custom_call.1} parent=1 // pred_region
      %187 = dma.done [#allocation4], 1024
    $region25: #{tpu_custom_call.1} parent=1 // pred_fallthru
      _
    %188 = vsyncpa [#allocation3], 1
    %189 = vsyncpa [#allocation6], 1
    %190 = vsyncpa [#allocation4], 1

</llo_original>
